<compile_context>
chip_gen: v5e
topology: v5e:2x2
jax: 0.10.0
libtpu: 0.0.40
codegen_flags: <defaults>
</compile_context>

<pallas_src>
import jax
import jax.numpy as jnp
from jax.experimental import pallas as pl
from jax.experimental.pallas import tpu as pltpu

# Per-head output sizes, in the order returned by the PyTorch module.
HEAD_NAMES = [
    "coref", "size", "available_sizes", "brand", "color", "pattern",
    "sleeve_length", "asset_type", "type", "price", "customer_review",
]
HEAD_DIMS = [2, 6, 6, 26, 71, 36, 6, 12, 18, 45, 26]
TOTAL_HEAD_DIM = sum(HEAD_DIMS)          # 254
HEAD_PAD_DIM = 256                        # padded to a multiple of 128 lanes


def _round_up(x, m):
    return ((x + m - 1) // m) * m


# --------------------------------------------------------------------------
# Parameter preparation: fold the two Linears into one affine map and pad.
# --------------------------------------------------------------------------
def fuse_params(params, *, use_bf16=True):
    """Fold aggregator + 11 heads into a single (Kp, 256) weight.

    params: dict with
      w_agg  (2H, 2H)   b_agg  (1, 2H)
      w_head (2H, 254)  b_head (1, 254)
    Weights are stored as (in_features, out_features), i.e. y = x @ W + b.
    The fold is exact affine composition (done in f32); biases stay f32.
    """
    w_agg = jnp.asarray(params["w_agg"], jnp.float32)
    b_agg = jnp.asarray(params["b_agg"], jnp.float32).reshape(1, -1)
    w_head = jnp.asarray(params["w_head"], jnp.float32)
    b_head = jnp.asarray(params["b_head"], jnp.float32).reshape(1, -1)

    two_h = w_agg.shape[0]
    assert w_agg.shape == (two_h, two_h)
    assert w_head.shape == (two_h, TOTAL_HEAD_DIM)

    w_fused = w_agg @ w_head                 # (2H, 254)
    b_fused = b_agg @ w_head + b_head        # (1, 254)

    pad_n = HEAD_PAD_DIM - TOTAL_HEAD_DIM    # 254 -> 256 (zero cols)
    k_pad = _round_up(two_h, 128)            # K -> multiple of 128 (zero rows)
    w_fused = jnp.pad(w_fused, ((0, k_pad - two_h), (0, pad_n)))
    b_fused = jnp.pad(b_fused, ((0, 0), (0, pad_n)))

    w_dtype = jnp.bfloat16 if use_bf16 else jnp.float32
    return {
        "w": w_fused.astype(w_dtype),   # (Kp, 256)
        "b": b_fused,                   # (1, 256) f32 (added to f32 accumulator)
        "two_h": int(two_h),
        "k_pad": int(k_pad),
    }


# --------------------------------------------------------------------------
# Kernel: one MXU matmul + fused bias epilogue per batch tile.
# --------------------------------------------------------------------------
def _fused_head_kernel(x_ref, w_ref, b_ref, out_ref):
    out_ref[...] = (
        jnp.dot(x_ref[...], w_ref[...], preferred_element_type=jnp.float32)
        + b_ref[...]
    ).astype(out_ref.dtype)


def _pick_batch_tile(batch, k_pad, x_itemsize, budget_bytes, tb_cap, row_align):
    """Largest batch tile (multiple of row_align, <= tb_cap) whose
    double-buffered x/out tiles plus the resident fused weight fit the
    generation-aware VMEM budget, while keeping >=2 grid steps for v7x
    megacore whenever the batch is large enough."""
    out_itemsize = 4
    # Resident fused weight + bias (account 2x: Pallas double-buffers inputs
    # by default even when the index_map is constant).
    weight_bytes = 2 * (k_pad * HEAD_PAD_DIM * x_itemsize + HEAD_PAD_DIM * 4)
    avail = max(budget_bytes - weight_bytes, 2 << 20)
    per_row = 2 * (k_pad * x_itemsize + HEAD_PAD_DIM * out_itemsize)
    tb = avail // per_row
    tb = max(row_align, min(tb_cap, (tb // row_align) * row_align))
    tb = min(tb, _round_up(max(batch, 1), row_align))   # don't tile past batch
    if batch >= 2 * row_align:
        # >=2 grid steps so the "parallel" axis can shard across both v7x TCs
        # (costs one extra ~0.35us step on single-TC v5e/v6e -- negligible).
        tb = min(tb, _round_up(pl.cdiv(batch, 2), row_align))
    return int(tb)


# --------------------------------------------------------------------------
# Wrapper
# --------------------------------------------------------------------------
def fashion_encoder_head(concat_vector, params=None, *, fused=None,
                         batch_tile=None, use_bf16=True, split_heads=True):
    """concat_vector: (B, 2*hidden_dim) float32.

    Either pass `params` (raw per-layer weights, folded here) or a
    pre-computed `fused = fuse_params(params, ...)` to hoist the fold out of
    the per-call path.  Returns the 11 per-head logit tuples (PyTorch order),
    or the fused (B, 254) logits if split_heads=False (avoids 11 extra HBM
    output copies for consumers that slice lazily).
    """
    if fused is None:
        fused = fuse_params(params, use_bf16=use_bf16)
    w, b = fused["w"], fused["b"]
    two_h, k_pad = fused["two_h"], fused["k_pad"]

    B = concat_vector.shape[0]
    assert concat_vector.shape[1] == two_h

    x = concat_vector.astype(w.dtype)
    if k_pad != two_h:
        x = jnp.pad(x, ((0, 0), (0, k_pad - two_h)))

    x_itemsize = jnp.dtype(w.dtype).itemsize
    out_itemsize = 4
    # bf16 packs two rows per sublane -> 16-row alignment keeps packing clean.
    row_align = 16 if x_itemsize == 2 else 8

    # Generation-aware VMEM budget.
    try:
        vmem_cap = int(pltpu.get_tpu_info().vmem_capacity_bytes)
    except Exception:
        vmem_cap = 64 << 20                     # v7x-safe fallback
    if vmem_cap >= (96 << 20):                  # v5e / v6e: 128 MiB physical
        budget, tb_cap = 88 << 20, 1024
    else:                                       # v7x: 64 MiB per TensorCore
        budget, tb_cap = 40 << 20, 512

    if batch_tile is None:
        tb = _pick_batch_tile(B, k_pad, x_itemsize, budget, tb_cap, row_align)
    else:
        tb = max(row_align, (int(batch_tile) // row_align) * row_align)

    B_pad = _round_up(max(B, 1), tb)
    if B_pad != B:
        x = jnp.pad(x, ((0, B_pad - B), (0, 0)))
    grid = (B_pad // tb,)

    # Explicit VMEM limit (dtype-aware; no 'agg' intermediate after the fold).
    vmem_bytes = (
        2 * tb * k_pad * x_itemsize                  # double-buffered x tiles
        + 2 * tb * HEAD_PAD_DIM * out_itemsize       # double-buffered out tiles
        + 2 * (k_pad * HEAD_PAD_DIM * x_itemsize + HEAD_PAD_DIM * 4)
    )
    vmem_limit = int(min(max(vmem_bytes * 5 // 4 + (1 << 20), 16 << 20),
                         vmem_cap))

    cost = pl.CostEstimate(
        flops=2 * B_pad * k_pad * HEAD_PAD_DIM,
        transcendentals=0,
        bytes_accessed=(
            B_pad * k_pad * x_itemsize
            + k_pad * HEAD_PAD_DIM * x_itemsize
            + HEAD_PAD_DIM * 4
            + B_pad * HEAD_PAD_DIM * out_itemsize
        ),
    )

    out = pl.pallas_call(
        _fused_head_kernel,
        out_shape=jax.ShapeDtypeStruct((B_pad, HEAD_PAD_DIM), jnp.float32),
        grid_spec=pltpu.PrefetchScalarGridSpec(
            num_scalar_prefetch=0,
            grid=grid,
            in_specs=[
                pl.BlockSpec((tb, k_pad), lambda i: (i, 0)),             # x
                pl.BlockSpec((k_pad, HEAD_PAD_DIM), lambda i: (0, 0)),   # W_fused
                pl.BlockSpec((1, HEAD_PAD_DIM), lambda i: (0, 0)),       # b_fused
            ],
            out_specs=pl.BlockSpec((tb, HEAD_PAD_DIM), lambda i: (i, 0)),
        ),
        compiler_params=pltpu.CompilerParams(
            dimension_semantics=("parallel",),   # independent batch tiles
            vmem_limit_bytes=vmem_limit,
        ),
        cost_estimate=cost,
    )(x, w, b)

    # Strip batch / lane padding (padded cols are exactly zero anyway).
    out = out[:B, :TOTAL_HEAD_DIM]
    if not split_heads:
        return out
    splits, off = [], 0
    for d in HEAD_DIMS:
        splits.append(out[:, off:off + d])
        off += d
    return tuple(splits)


# --------------------------------------------------------------------------
# Synthetic params + plain-JAX two-stage reference (matches PyTorch math).
# --------------------------------------------------------------------------
def init_params(key, hidden_dim):
    two_h = 2 * hidden_dim
    k0, k1, k2, k3 = jax.random.split(key, 4)
    scale = 1.0 / jnp.sqrt(two_h)
    w_agg = jax.random.normal(k0, (two_h, two_h), jnp.float32) * scale
    b_agg = jax.random.normal(k1, (1, two_h), jnp.float32) * 0.01
    w_head = jax.random.normal(k2, (two_h, TOTAL_HEAD_DIM), jnp.float32) * scale
    b_head = jax.random.normal(k3, (1, TOTAL_HEAD_DIM), jnp.float32) * 0.01
    return {"w_agg": w_agg, "b_agg": b_agg, "w_head": w_head, "b_head": b_head}


def _reference(concat_vector, params):
    agg = concat_vector @ params["w_agg"] + params["b_agg"]
    out = agg @ params["w_head"] + params["b_head"]
    splits, off = [], 0
    for d in HEAD_DIMS:
        splits.append(out[:, off:off + d])
        off += d
    return tuple(splits)


if __name__ == "__main__":
    hidden_dim = 32            # small synthetic size; 2*hidden_dim = 64
    batch = 8
    key = jax.random.PRNGKey(0)
    k_params, k_x = jax.random.split(key)

    params = init_params(k_params, hidden_dim)
    concat_vector = jax.random.normal(
        k_x, (batch, 2 * hidden_dim), jnp.float32
    )
    refs = _reference(concat_vector, params)

    # 1) Strict f32 path: tight check against the unfolded two-matmul
    #    reference (validates the affine fold + padding are exact).
    outs_f32 = jax.block_until_ready(
        fashion_encoder_head(concat_vector, params, use_bf16=False))
    for name, d, o, r in zip(HEAD_NAMES, HEAD_DIMS, outs_f32, refs):
        assert o.shape == (batch, d), (name, o.shape)
        assert jnp.allclose(o, r, atol=1e-4, rtol=1e-4), name

    # 2) Default bf16 path: tight check against the same fused bf16 math in
    #    plain JAX (kernel mechanics), loose sanity check against f32 ref.
    fused = fuse_params(params, use_bf16=True)
    outs_bf16 = jax.block_until_ready(
        fashion_encoder_head(concat_vector, fused=fused))
    x_p = jnp.pad(concat_vector.astype(jnp.bfloat16),
                  ((0, 0), (0, fused["k_pad"] - fused["two_h"])))
    fused_ref = (jnp.dot(x_p, fused["w"], preferred_element_type=jnp.float32)
                 + fused["b"])[:, :TOTAL_HEAD_DIM]
    off = 0
    for name, d, o, r in zip(HEAD_NAMES, HEAD_DIMS, outs_bf16, refs):
        assert o.shape == (batch, d), (name, o.shape)
        assert jnp.allclose(o, fused_ref[:, off:off + d], atol=5e-3), name
        assert jnp.allclose(o, r, atol=0.3), name   # bf16 rounding tolerance
        off += d

    print("KERNEL_OK")
</pallas_src>

<mosaic_0001>
module attributes {stable_mosaic.version = 11 : i64} {
  func.func @_fused_head_kernel(%arg0: i32, %arg1: memref<8x128xf32, #tpu.memory_space<vmem>>, %arg2: memref<128x256xf32, #tpu.memory_space<vmem>>, %arg3: memref<1x256xf32, #tpu.memory_space<vmem>>, %arg4: memref<8x256xf32, #tpu.memory_space<vmem>>) attributes {dimension_semantics = [#tpu.dimension_semantics<parallel>], iteration_bounds = array<i64: 1>, scalar_prefetch = 0 : i64, scratch_operands = 0 : i64, tpu.core_type = #tpu.core_type<tc>, window_params = [{transform_indices = @transform_0, window_bounds = array<i64: 8, 128>}, {pipeline_mode = #tpu.pipeline_mode<synchronous>, transform_indices = @transform_1, window_bounds = array<i64: 128, 256>}, {pipeline_mode = #tpu.pipeline_mode<synchronous>, transform_indices = @transform_2, window_bounds = array<i64: 1, 256>}, {transform_indices = @transform_3, window_bounds = array<i64: 8, 256>}]} {
    %c0 = arith.constant 0 : index
    %c0_0 = arith.constant 0 : index
    %0 = vector.load %arg1[%c0, %c0_0] : memref<8x128xf32, #tpu.memory_space<vmem>>, vector<8x128xf32>
    %c0_1 = arith.constant 0 : index
    %c0_2 = arith.constant 0 : index
    %1 = vector.load %arg2[%c0_1, %c0_2] : memref<128x256xf32, #tpu.memory_space<vmem>>, vector<128x256xf32>
    %cst = arith.constant dense<0.000000e+00> : vector<8x256xf32>
    %2 = tpu.matmul %0, %1, %cst {dimension_numbers = #tpu.dot_dimension_numbers<[1], [0], [0], [1], [0, 0, 1, 1], [], []>} : vector<8x128xf32>, vector<128x256xf32>, vector<8x256xf32> -> vector<8x256xf32>
    %c0_3 = arith.constant 0 : index
    %c0_4 = arith.constant 0 : index
    %3 = vector.load %arg3[%c0_3, %c0_4] : memref<1x256xf32, #tpu.memory_space<vmem>>, vector<1x256xf32>
    %4 = vector.broadcast %3 : vector<1x256xf32> to vector<8x256xf32>
    %5 = arith.addf %2, %4 : vector<8x256xf32>
    %c0_5 = arith.constant 0 : index
    %c0_6 = arith.constant 0 : index
    %6 = vector.load %arg4[%c0_5, %c0_6] : memref<8x256xf32, #tpu.memory_space<vmem>>, vector<8x256xf32>
    tpu.vector_store %arg4[%c0_5, %c0_6], %5 {strides = array<i32>} : memref<8x256xf32, #tpu.memory_space<vmem>>, vector<8x256xf32>,
    return
  }
  func.func @transform_0(%arg0: i32) -> (i32, i32) {
    %c0_i32 = arith.constant 0 : i32
    %c0_i32_0 = arith.constant 0 : i32
    return %arg0, %c0_i32 : i32, i32
  }
  func.func @transform_1(%arg0: i32) -> (i32, i32) {
    %c0_i32 = arith.constant 0 : i32
    %c0_i32_0 = arith.constant 0 : i32
    %c0_i32_1 = arith.constant 0 : i32
    return %c0_i32, %c0_i32_0 : i32, i32
  }
  func.func @transform_2(%arg0: i32) -> (i32, i32) {
    %c0_i32 = arith.constant 0 : i32
    %c0_i32_0 = arith.constant 0 : i32
    %c0_i32_1 = arith.constant 0 : i32
    return %c0_i32, %c0_i32_0 : i32, i32
  }
  func.func @transform_3(%arg0: i32) -> (i32, i32) {
    %c0_i32 = arith.constant 0 : i32
    %c0_i32_0 = arith.constant 0 : i32
    return %arg0, %c0_i32 : i32, i32
  }
}

</mosaic_0001>

<llo_original>
// kernel: tpu_custom_call.1
$region0: #{tpu_custom_call.1}
  #allocation0 [shape = 'u32[]', space=smem, size = 0x4, offset = 0x4, fixed_abs, tag = 'smem constant byte address 0x4 - core index']
  #allocation1 [shape = 'u32[72,128]{1,0:T(1,128)}', space=vmem, size = 0x9000, scoped, tag = 'internal scratch']
  %s0 = inlined_call_operand.hbm [shape: f32[8,128], index: 0, kind: input, shape index: {}]
  %s1 = inlined_call_operand.hbm [shape: f32[128,256], index: 1, kind: input, shape index: {}]
  %s2 = inlined_call_operand.hbm [shape: f32[1,256], index: 2, kind: input, shape index: {}]
  %s3 = inlined_call_operand.hbm [shape: f32[8,256], index: 3, kind: output, shape index: {}]
  %s4 = sld [smem:[#allocation0]]
  $region34: #{tpu_custom_call.1} parent=0
    _
  %s6 = ssub.s32 1, %s4
  %s7 = scalar_select 0, %s6, %s4
  $region1: #{tpu_custom_call.1} parent=0
    #allocation2 [shape = 'u8[4096]{0}', space=vmem, size = 0x1000, scoped, tag = 'input window, operand 0, single buffered']
    #allocation3 [shape = 's32[1]{0}', space=sflag, size = 0x4, scoped, tag = 'scoped memory for tpu_custom_call.1']
    #allocation4 [shape = 's32[1]{0}', space=sflag, size = 0x4, scoped, tag = 'scoped memory for tpu_custom_call.1']
    #allocation5 [shape = 'u8[131072]{0}', space=vmem, size = 0x20000, scoped, tag = 'input window, operand 1, single buffered']
    #allocation6 [shape = 's32[1]{0}', space=sflag, size = 0x4, scoped, tag = 'scoped memory for tpu_custom_call.1']
    #allocation7 [shape = 'u8[1024]{0}', space=vmem, size = 0x400, scoped, tag = 'input window, operand 2, single buffered']
    #allocation8 [shape = 'u8[8192]{0}', space=vmem, size = 0x2000, scoped, tag = 'output window, operand 0, single buffered']
    %8 = vsyncpa [#allocation3], 0
    %9 = vsyncpa [#allocation6], 0
    %10 = vsyncpa [#allocation4], 0
    // Predicated region
    $region2: #{tpu_custom_call.1} parent=1 // pred_check
      _
    $region3: #{tpu_custom_call.1} parent=1 // pred_check_branch
      %12 = sbr.rel (0) target = $region5
    $region4: #{tpu_custom_call.1} parent=1 // pred_region
      %14 = vsyncadd [#allocation3], 0
      %s16 = sshll.u32 %s0, 4
      %s17 = int_to_ptr.hbm [resolvable:$true] %s16
      %s18 = sshll.u32 [#allocation2], 4
      %s19 = int_to_ptr.vmem [resolvable:$true] %s18
      %21 = dma.hbm_to_vmem [thread:$0]  %s17, 128, %s19, [#allocation3]
    $region5: #{tpu_custom_call.1} parent=1 // pred_fallthru
      _
    // Predicated region
    $region6: #{tpu_custom_call.1} parent=1 // pred_check
      _
    $region7: #{tpu_custom_call.1} parent=1 // pred_check_branch
      %23 = sbr.rel (0) target = $region9
    $region8: #{tpu_custom_call.1} parent=1 // pred_region
      %25 = vsyncadd [#allocation6], 0
      %s26 = sshll.u32 %s1, 4
      %s27 = int_to_ptr.hbm [resolvable:$true] %s26
      %s28 = sshll.u32 [#allocation5], 4
      %s29 = int_to_ptr.vmem [resolvable:$true] %s28
      %34 = dma.hbm_to_vmem [thread:$0]  %s27, 4096, %s29, [#allocation6], 256, 256, 16
    $region9: #{tpu_custom_call.1} parent=1 // pred_fallthru
      _
    // Predicated region
    $region10: #{tpu_custom_call.1} parent=1 // pred_check
      _
    $region11: #{tpu_custom_call.1} parent=1 // pred_check_branch
      %36 = sbr.rel (0) target = $region13
    $region12: #{tpu_custom_call.1} parent=1 // pred_region
      %38 = vsyncadd [#allocation6], 0
      %s40 = sshll.u32 %s2, 4
      %s41 = int_to_ptr.hbm [resolvable:$true] %s40
      %s42 = sshll.u32 [#allocation7], 4
      %s43 = int_to_ptr.vmem [resolvable:$true] %s42
      %45 = dma.hbm_to_vmem [thread:$0]  %s41, 32, %s43, [#allocation6]
    $region13: #{tpu_custom_call.1} parent=1 // pred_fallthru
      _
    // Predicated region
    $region14: #{tpu_custom_call.1} parent=1 // pred_check
      _
    $region15: #{tpu_custom_call.1} parent=1 // pred_check_branch
      %47 = sbr.rel (0) target = $region17
    $region16: #{tpu_custom_call.1} parent=1 // pred_region
      %49 = dma.done [#allocation3], 128
    $region17: #{tpu_custom_call.1} parent=1 // pred_fallthru
      _
    // Predicated region
    $region18: #{tpu_custom_call.1} parent=1 // pred_check
      _
    $region19: #{tpu_custom_call.1} parent=1 // pred_check_branch
      %51 = sbr.rel (0) target = $region21
    $region20: #{tpu_custom_call.1} parent=1 // pred_region
      %53 = dma.done [#allocation6], 4096
    $region21: #{tpu_custom_call.1} parent=1 // pred_fallthru
      _
    // Predicated region
    $region22: #{tpu_custom_call.1} parent=1 // pred_check
      _
    $region23: #{tpu_custom_call.1} parent=1 // pred_check_branch
      %55 = sbr.rel (0) target = $region25
    $region24: #{tpu_custom_call.1} parent=1 // pred_region
      %57 = dma.done [#allocation6], 32
    $region25: #{tpu_custom_call.1} parent=1 // pred_fallthru
      _
    %v58 = vld [vmem:[#allocation2] sm:$0xff]
    %v59 = vld [vmem:[#allocation5] sm:$0xff]
    %v60 = vld [vmem:[#allocation5 + $0x8] sm:$0xff]
    %v61 = vld [vmem:[#allocation5 + $0x10] sm:$0xff]
    %v62 = vld [vmem:[#allocation5 + $0x18] sm:$0xff]
    %v63 = vld [vmem:[#allocation5 + $0x20] sm:$0xff]
    %v64 = vld [vmem:[#allocation5 + $0x28] sm:$0xff]
    %v65 = vld [vmem:[#allocation5 + $0x30] sm:$0xff]
    %v66 = vld [vmem:[#allocation5 + $0x38] sm:$0xff]
    %v67 = vld [vmem:[#allocation5 + $0x40] sm:$0xff]
    %v68 = vld [vmem:[#allocation5 + $0x48] sm:$0xff]
    %v69 = vld [vmem:[#allocation5 + $0x50] sm:$0xff]
    %v70 = vld [vmem:[#allocation5 + $0x58] sm:$0xff]
    %v71 = vld [vmem:[#allocation5 + $0x60] sm:$0xff]
    %v72 = vld [vmem:[#allocation5 + $0x68] sm:$0xff]
    %v73 = vld [vmem:[#allocation5 + $0x70] sm:$0xff]
    %v74 = vld [vmem:[#allocation5 + $0x78] sm:$0xff]
    %v75 = vld [vmem:[#allocation5 + $0x80] sm:$0xff]
    %v76 = vld [vmem:[#allocation5 + $0x88] sm:$0xff]
    %v77 = vld [vmem:[#allocation5 + $0x90] sm:$0xff]
    %v78 = vld [vmem:[#allocation5 + $0x98] sm:$0xff]
    %v79 = vld [vmem:[#allocation5 + $0xa0] sm:$0xff]
    %v80 = vld [vmem:[#allocation5 + $0xa8] sm:$0xff]
    %v81 = vld [vmem:[#allocation5 + $0xb0] sm:$0xff]
    %v82 = vld [vmem:[#allocation5 + $0xb8] sm:$0xff]
    %v83 = vld [vmem:[#allocation5 + $0xc0] sm:$0xff]
    %v84 = vld [vmem:[#allocation5 + $0xc8] sm:$0xff]
    %v85 = vld [vmem:[#allocation5 + $0xd0] sm:$0xff]
    %v86 = vld [vmem:[#allocation5 + $0xd8] sm:$0xff]
    %v87 = vld [vmem:[#allocation5 + $0xe0] sm:$0xff]
    %v88 = vld [vmem:[#allocation5 + $0xe8] sm:$0xff]
    %v89 = vld [vmem:[#allocation5 + $0xf0] sm:$0xff]
    %v90 = vld [vmem:[#allocation5 + $0xf8] sm:$0xff]
    %v91 = vld [vmem:[#allocation7] sm:$0x3]
    %v93 = vperm.slane %v91, 0
    %v94 = vperm.slane %v91, 1
    %97 = vmatpush.msra.mxu0 %v89
    %98 = vmatpush.msra.mxu0 %v87
    %99 = vmatpush.msra.mxu0 %v85
    %100 = vmatpush.msra.mxu0 %v83
    %101 = vmatpush.msra.mxu0 %v81
    %102 = vmatpush.msra.mxu0 %v79
    %103 = vmatpush.msra.mxu0 %v77
    %104 = vmatpush.msra.mxu0 %v75
    %105 = vmatpush.msra.mxu0 %v73
    %106 = vmatpush.msra.mxu0 %v71
    %107 = vmatpush.msra.mxu0 %v69
    %108 = vmatpush.msra.mxu0 %v67
    %109 = vmatpush.msra.mxu0 %v65
    %110 = vmatpush.msra.mxu0 %v63
    %111 = vmatpush.msra.mxu0 %v61
    %112 = vmatpush.msra.mxu0 %v59
    %113 = vmatmul.f32.gmra.mxu0 %v58
    %v114 = vpop.f32.mrf.mxu0
    %v115 = vadd.f32 %v93, %v114
    %116 = vdwg.mxu0
    %117 = vmatpush.msra.mxu0 %v90
    %118 = vmatpush.msra.mxu0 %v88
    %119 = vmatpush.msra.mxu0 %v86
    %120 = vmatpush.msra.mxu0 %v84
    %121 = vmatpush.msra.mxu0 %v82
    %122 = vmatpush.msra.mxu0 %v80
    %123 = vmatpush.msra.mxu0 %v78
    %124 = vmatpush.msra.mxu0 %v76
    %125 = vmatpush.msra.mxu0 %v74
    %126 = vmatpush.msra.mxu0 %v72
    %127 = vmatpush.msra.mxu0 %v70
    %128 = vmatpush.msra.mxu0 %v68
    %129 = vmatpush.msra.mxu0 %v66
    %130 = vmatpush.msra.mxu0 %v64
    %131 = vmatpush.msra.mxu0 %v62
    %132 = vmatpush.msra.mxu0 %v60
    %133 = vmatmul.f32.gmra.mxu0 %v58
    %v134 = vpop.f32.mrf.mxu0
    %v135 = vadd.f32 %v94, %v134
    %136 = vdwg.mxu0
    %137 = vst [vmem:[#allocation8] sm:$0xff] %v115
    %138 = vst [vmem:[#allocation8 + $0x8] sm:$0xff] %v135
    // Predicated region
    $region26: #{tpu_custom_call.1} parent=1 // pred_check
      _
    $region27: #{tpu_custom_call.1} parent=1 // pred_check_branch
      %140 = sbr.rel (0) target = $region29
    $region28: #{tpu_custom_call.1} parent=1 // pred_region
      %142 = vsyncadd [#allocation4], 0
      %s144 = sshll.u32 [#allocation8], 4
      %s145 = int_to_ptr.vmem [resolvable:$true] %s144
      %s146 = sshll.u32 %s3, 4
      %s147 = int_to_ptr.hbm [resolvable:$true] %s146
      %149 = dma.vmem_to_hbm [thread:$0]  %s145, 256, %s147, [#allocation4]
    $region29: #{tpu_custom_call.1} parent=1 // pred_fallthru
      _
    // Predicated region
    $region30: #{tpu_custom_call.1} parent=1 // pred_check
      _
    $region31: #{tpu_custom_call.1} parent=1 // pred_check_branch
      %151 = sbr.rel (0) target = $region33
    $region32: #{tpu_custom_call.1} parent=1 // pred_region
      %153 = dma.done [#allocation4], 256
    $region33: #{tpu_custom_call.1} parent=1 // pred_fallthru
      _
    %154 = vsyncpa [#allocation3], 1
    %155 = vsyncpa [#allocation6], 1
    %156 = vsyncpa [#allocation4], 1

</llo_original>
